<compile_context>
chip_gen: v7x
topology: tpu7x:2x2x1
jax: 0.10.0
libtpu: 0.0.40
codegen_flags: <defaults>
</compile_context>

<pallas_src>
import jax
import jax.numpy as jnp
from jax import lax
from jax.experimental import pallas as pl
from jax.experimental.pallas import tpu as pltpu


def _round_up(x: int, m: int) -> int:
    return ((x + m - 1) // m) * m


def _skipgram_kernel(x_ref, w_ref, b_ref, out_ref):
    """One grid step = one (batch tile, vocab tile) pair.

    x_ref  : VMEM (Tb, D)  f32   gathered embedding rows for this batch tile
    w_ref  : VMEM (Tv, D)  f32   Linear weight vocab tile (streamed from HBM)
    b_ref  : VMEM (1, Tv)  f32   bias tile
    out_ref: VMEM (Tb, Tv) f32   logits tile (lane/sublane dense)
    """
    # x @ w.T contracted on D -> single MXU matmul with f32 accumulation.
    # TODO(synk): verify via pl.lower_as_mlir that the rhs-transposed
    # dot_general does not emit a per-tile XLU vxpose; if it does, store the
    # Linear weight as (D, V) at parameter level and stream (D, Tv) tiles.
    logits = lax.dot_general(
        x_ref[...], w_ref[...],
        dimension_numbers=(((1,), (1,)), ((), ())),
        preferred_element_type=jnp.float32,
    )
    out_ref[...] = (logits + b_ref[...]).astype(out_ref.dtype)


def _choose_vocab_tile(v_pad: int, max_tv: int) -> int:
    """Largest lane-aligned (multiple of 256) tile dividing v_pad, <= max_tv."""
    best = 256
    t = 256
    limit = min(v_pad, max_tv)
    while t <= limit:
        if v_pad % t == 0:
            best = t
        t += 256
    # Prefer >= 2 vocab tiles so the 'parallel' axis feeds both v7x TCs.
    if best == v_pad and v_pad >= 512:
        best = v_pad // 2          # still a multiple of 128 (v_pad % 256 == 0)
    return best


@jax.jit
def skipgram_forward(input_word, embedding, weight, bias):
    """input_word: (B,) int; embedding: (V, D); weight: (V, D); bias: (V,)."""
    B = input_word.shape[0]
    V, D = embedding.shape
    assert weight.shape == (V, D)
    assert bias.shape == (V,)

    # ---- Embedding gather hoisted to XLA (gather clamps OOB ids safely). ----
    x = embedding[input_word.astype(jnp.int32)]          # (B, D) f32

    # ---- Batch tiling: sublane-dense (multiple of 8); 256-row tiles if big. --
    Tb = 256 if B >= 256 else _round_up(B, 8)
    B_pad = _round_up(B, Tb)
    if B_pad != B:
        x = jnp.pad(x, ((0, B_pad - B), (0, 0)))

    # ---- Vocab padding to a multiple of 256: streamed tiles for any V. ------
    V_pad = _round_up(V, 256)
    if V_pad != V:
        weight = jnp.pad(weight, ((0, V_pad - V), (0, 0)))
        bias = jnp.pad(bias, (0, V_pad - V))
    bias2 = bias.reshape(1, V_pad)

    # ---- Generation-aware VMEM budget -> vocab tile size. -------------------
    try:
        vmem_cap = int(pltpu.get_tpu_info().vmem_capacity_bytes)
    except Exception:  # conservative fallback: v7x per-TC VMEM
        vmem_cap = 64 * 1024 * 1024
    f32b = 4
    budget = int(0.6 * vmem_cap)
    fixed = 2 * Tb * D * f32b                    # double-buffered x tile
    per_tv = 2 * f32b * (D + 1 + Tb)             # dbuf weight + bias + output
    max_tv = max(256, min(8192, (budget - fixed) // per_tv))
    Tv = _choose_vocab_tile(V_pad, max_tv)
    nb, nv = B_pad // Tb, V_pad // Tv

    vmem_needed = fixed + per_tv * Tv
    vmem_limit = int(min(vmem_cap - 8 * 1024 * 1024,
                         max(2 * vmem_needed, 32 * 1024 * 1024)))

    out = pl.pallas_call(
        _skipgram_kernel,
        out_shape=jax.ShapeDtypeStruct((B_pad, V_pad), jnp.float32),
        grid=(nb, nv),
        in_specs=[
            # Gathered embeddings: one (Tb, D) block per batch tile.
            pl.BlockSpec((Tb, D), lambda i, j: (i, 0)),
            # Linear weight streamed one (Tv, D) vocab tile per step.
            pl.BlockSpec((Tv, D), lambda i, j: (j, 0)),
            # Matching bias tile.
            pl.BlockSpec((1, Tv), lambda i, j: (0, j)),
        ],
        out_specs=pl.BlockSpec((Tb, Tv), lambda i, j: (i, j)),
        compiler_params=pltpu.CompilerParams(
            # Both axes independent -> shard across TCs (v7x megacore).
            dimension_semantics=("parallel", "parallel"),
            vmem_limit_bytes=vmem_limit,
        ),
    )(x, weight, bias2)

    return out[:B, :V]


if __name__ == "__main__":
    # Small, deterministic setup consistent with SkipGramModel.__init__
    vocab_size = 256
    embedding_dim = 128
    batch = 8

    key = jax.random.PRNGKey(0)
    k_emb, k_w, k_b, k_idx = jax.random.split(key, 4)

    # nn.Embedding default init: N(0, 1)
    embedding = jax.random.normal(k_emb, (vocab_size, embedding_dim),
                                  dtype=jnp.float32)
    # nn.Linear default init: U(-1/sqrt(D), 1/sqrt(D)) for weight and bias
    bound = 1.0 / jnp.sqrt(float(embedding_dim))
    weight = jax.random.uniform(k_w, (vocab_size, embedding_dim),
                                minval=-bound, maxval=bound, dtype=jnp.float32)
    bias = jax.random.uniform(k_b, (vocab_size,),
                              minval=-bound, maxval=bound, dtype=jnp.float32)

    input_word = jax.random.randint(k_idx, (batch,), 0, vocab_size,
                                    dtype=jnp.int32)

    out = skipgram_forward(input_word, embedding, weight, bias)
    out = jax.block_until_ready(out)

    # Pure-JAX reference check
    ref = embedding[input_word] @ weight.T + bias
    assert out.shape == (batch, vocab_size)
    assert jnp.allclose(out, ref, atol=1e-5, rtol=1e-5), "mismatch vs reference"

    print("KERNEL_OK")
</pallas_src>

<mosaic_0001>
module attributes {stable_mosaic.version = 11 : i64} {
  func.func @_skipgram_kernel(%arg0: i32, %arg1: i32, %arg2: memref<8x128xf32, #tpu.memory_space<vmem>>, %arg3: memref<256x128xf32, #tpu.memory_space<vmem>>, %arg4: memref<1x256xf32, #tpu.memory_space<vmem>>, %arg5: memref<8x256xf32, #tpu.memory_space<vmem>>) attributes {dimension_semantics = [#tpu.dimension_semantics<parallel>, #tpu.dimension_semantics<parallel>], iteration_bounds = array<i64: 1, 1>, scalar_prefetch = 0 : i64, scratch_operands = 0 : i64, tpu.core_type = #tpu.core_type<tc>, window_params = [{transform_indices = @transform_0, window_bounds = array<i64: 8, 128>}, {transform_indices = @transform_1, window_bounds = array<i64: 256, 128>}, {transform_indices = @transform_2, window_bounds = array<i64: 1, 256>}, {transform_indices = @transform_3, window_bounds = array<i64: 8, 256>}]} {
    %c0 = arith.constant 0 : index
    %c0_0 = arith.constant 0 : index
    %0 = vector.load %arg2[%c0, %c0_0] : memref<8x128xf32, #tpu.memory_space<vmem>>, vector<8x128xf32>
    %c0_1 = arith.constant 0 : index
    %c0_2 = arith.constant 0 : index
    %1 = vector.load %arg3[%c0_1, %c0_2] : memref<256x128xf32, #tpu.memory_space<vmem>>, vector<256x128xf32>
    %cst = arith.constant dense<0.000000e+00> : vector<8x256xf32>
    %2 = tpu.matmul %0, %1, %cst {dimension_numbers = #tpu.dot_dimension_numbers<[1], [1], [0], [0], [0, 0, 1, 0], [], []>} : vector<8x128xf32>, vector<256x128xf32>, vector<8x256xf32> -> vector<8x256xf32>
    %c0_3 = arith.constant 0 : index
    %c0_4 = arith.constant 0 : index
    %3 = vector.load %arg4[%c0_3, %c0_4] : memref<1x256xf32, #tpu.memory_space<vmem>>, vector<1x256xf32>
    %4 = vector.broadcast %3 : vector<1x256xf32> to vector<8x256xf32>
    %5 = arith.addf %2, %4 : vector<8x256xf32>
    %c0_5 = arith.constant 0 : index
    %c0_6 = arith.constant 0 : index
    %6 = vector.load %arg5[%c0_5, %c0_6] : memref<8x256xf32, #tpu.memory_space<vmem>>, vector<8x256xf32>
    tpu.vector_store %arg5[%c0_5, %c0_6], %5 {strides = array<i32>} : memref<8x256xf32, #tpu.memory_space<vmem>>, vector<8x256xf32>,
    return
  }
  func.func @transform_0(%arg0: i32, %arg1: i32) -> (i32, i32) {
    %c0_i32 = arith.constant 0 : i32
    %c0_i32_0 = arith.constant 0 : i32
    return %arg0, %c0_i32 : i32, i32
  }
  func.func @transform_1(%arg0: i32, %arg1: i32) -> (i32, i32) {
    %c0_i32 = arith.constant 0 : i32
    %c0_i32_0 = arith.constant 0 : i32
    return %arg1, %c0_i32 : i32, i32
  }
  func.func @transform_2(%arg0: i32, %arg1: i32) -> (i32, i32) {
    %c0_i32 = arith.constant 0 : i32
    %c0_i32_0 = arith.constant 0 : i32
    return %c0_i32, %arg1 : i32, i32
  }
  func.func @transform_3(%arg0: i32, %arg1: i32) -> (i32, i32) {
    %c0_i32 = arith.constant 0 : i32
    return %arg0, %arg1 : i32, i32
  }
}

</mosaic_0001>

<llo_original>
// kernel: skipgram_forward.1
$region0: #{skipgram_forward.1}
  #allocation0 [shape = 'u32[]', space=smem, size = 0x4, offset = 0x4, fixed_abs, tag = 'smem constant byte address 0x4 - core index']
  #allocation1 [shape = 'u32[144,128]{1,0:T(1,128)}', space=vmem, size = 0x12000, scoped, tag = 'internal scratch']
  %s0 = inlined_call_operand.vmem [shape: f32[8,128], index: 0, kind: input, shape index: {}]
  %s1 = inlined_call_operand.hbm [shape: f32[256,128], index: 1, kind: input, shape index: {}]
  %s2 = inlined_call_operand.vmem [shape: f32[1,256], index: 2, kind: input, shape index: {}]
  %s3 = inlined_call_operand.hbm [shape: f32[8,256], index: 3, kind: output, shape index: {}]
  %s4 = sld [smem:[#allocation0]]
  $region26: #{skipgram_forward.1} parent=0
    _
  %s6 = ssub.s32 1, %s4
  %s7 = scalar_select 0, %s6, %s4
  $region1: #{skipgram_forward.1} parent=0
    #allocation2 [shape = 'u8[131072]{0}', space=vmem, size = 0x20000, scoped, tag = 'input window, operand 1, single buffered']
    #allocation3 [shape = 's32[1]{0}', space=sflag, size = 0x4, scoped, tag = 'scoped memory for skipgram_forward.1']
    #allocation4 [shape = 's32[1]{0}', space=sflag, size = 0x4, scoped, tag = 'scoped memory for skipgram_forward.1']
    #allocation5 [shape = 'u8[8192]{0}', space=vmem, size = 0x2000, scoped, tag = 'output window, operand 0, single buffered']
    %8 = vsyncpa [#allocation3], 0
    %9 = vsyncpa [#allocation4], 0
    // Predicated region
    $region2: #{skipgram_forward.1} parent=1 // pred_check
      _
    $region3: #{skipgram_forward.1} parent=1 // pred_check_branch
      %11 = sbr.rel (0) target = $region5
    $region4: #{skipgram_forward.1} parent=1 // pred_region
      _
    $region5: #{skipgram_forward.1} parent=1 // pred_fallthru
      _
    // Predicated region
    $region6: #{skipgram_forward.1} parent=1 // pred_check
      _
    $region7: #{skipgram_forward.1} parent=1 // pred_check_branch
      %13 = sbr.rel (0) target = $region9
    $region8: #{skipgram_forward.1} parent=1 // pred_region
      %s15 = ssub.s32 4096, 4096
      %16 = vsyncadd [#allocation3], %s15
      %s17 = sshll.u32 [#allocation2], 4
      %s18 = int_to_ptr.vmem [resolvable:$true] %s17
      %23 = dma.hbm_to_vmem [thread:$0]  %s1, 4096, %s18, [#allocation3], 128, 128, 8
    $region9: #{skipgram_forward.1} parent=1 // pred_fallthru
      _
    // Predicated region
    $region10: #{skipgram_forward.1} parent=1 // pred_check
      _
    $region11: #{skipgram_forward.1} parent=1 // pred_check_branch
      %25 = sbr.rel (0) target = $region13
    $region12: #{skipgram_forward.1} parent=1 // pred_region
      _
    $region13: #{skipgram_forward.1} parent=1 // pred_fallthru
      _
    // Predicated region
    $region14: #{skipgram_forward.1} parent=1 // pred_check
      _
    $region15: #{skipgram_forward.1} parent=1 // pred_check_branch
      %27 = sbr.rel (0) target = $region17
    $region16: #{skipgram_forward.1} parent=1 // pred_region
      %28 = dma.done [#allocation3], 4096
    $region17: #{skipgram_forward.1} parent=1 // pred_fallthru
      _
    %v29 = vld [vmem:[%s0] sm:$0xff]
    %v30 = vld [vmem:[#allocation2] sm:$0xff]
    %v31 = vld [vmem:[#allocation2 + $0x8] sm:$0xff]
    %v32 = vld [vmem:[#allocation2 + $0x10] sm:$0xff]
    %v33 = vld [vmem:[#allocation2 + $0x18] sm:$0xff]
    %v34 = vld [vmem:[#allocation2 + $0x20] sm:$0xff]
    %v35 = vld [vmem:[#allocation2 + $0x28] sm:$0xff]
    %v36 = vld [vmem:[#allocation2 + $0x30] sm:$0xff]
    %v37 = vld [vmem:[#allocation2 + $0x38] sm:$0xff]
    %v38 = vld [vmem:[#allocation2 + $0x40] sm:$0xff]
    %v39 = vld [vmem:[#allocation2 + $0x48] sm:$0xff]
    %v40 = vld [vmem:[#allocation2 + $0x50] sm:$0xff]
    %v41 = vld [vmem:[#allocation2 + $0x58] sm:$0xff]
    %v42 = vld [vmem:[#allocation2 + $0x60] sm:$0xff]
    %v43 = vld [vmem:[#allocation2 + $0x68] sm:$0xff]
    %v44 = vld [vmem:[#allocation2 + $0x70] sm:$0xff]
    %v45 = vld [vmem:[#allocation2 + $0x78] sm:$0xff]
    %v46 = vld [vmem:[#allocation2 + $0x80] sm:$0xff]
    %v47 = vld [vmem:[#allocation2 + $0x88] sm:$0xff]
    %v48 = vld [vmem:[#allocation2 + $0x90] sm:$0xff]
    %v49 = vld [vmem:[#allocation2 + $0x98] sm:$0xff]
    %v50 = vld [vmem:[#allocation2 + $0xa0] sm:$0xff]
    %v51 = vld [vmem:[#allocation2 + $0xa8] sm:$0xff]
    %v52 = vld [vmem:[#allocation2 + $0xb0] sm:$0xff]
    %v53 = vld [vmem:[#allocation2 + $0xb8] sm:$0xff]
    %v54 = vld [vmem:[#allocation2 + $0xc0] sm:$0xff]
    %v55 = vld [vmem:[#allocation2 + $0xc8] sm:$0xff]
    %v56 = vld [vmem:[#allocation2 + $0xd0] sm:$0xff]
    %v57 = vld [vmem:[#allocation2 + $0xd8] sm:$0xff]
    %v58 = vld [vmem:[#allocation2 + $0xe0] sm:$0xff]
    %v59 = vld [vmem:[#allocation2 + $0xe8] sm:$0xff]
    %v60 = vld [vmem:[#allocation2 + $0xf0] sm:$0xff]
    %v61 = vld [vmem:[#allocation2 + $0xf8] sm:$0xff]
    %v62 = vld [vmem:[%s2] sm:$0x3]
    %v64 = vlaneseq
    %v65 = vshrl.u32 %v64, 7
    %v66 = vsub.s32 0, %v65
    %v67 = vrot.slane %v62, %v66
    %v68 = vlaneseq
    %v69 = vshrl.u32 %v68, 7
    %v70 = vsub.s32 1, %v69
    %v71 = vrot.slane %v62, %v70
    %74 = vmatprep.subr.mxu0 0.0
    %75 = vmatpush1.xpose.msra.mxu0 %v30
    %76 = vmatprep.subr.mxu0 0.0
    %77 = vmatpush1.xpose.msra.mxu0 %v31
    %78 = vmatprep.subr.mxu0 0.0
    %79 = vmatpush1.xpose.msra.mxu0 %v32
    %80 = vmatprep.subr.mxu0 0.0
    %81 = vmatpush1.xpose.msra.mxu0 %v33
    %82 = vmatprep.subr.mxu0 0.0
    %83 = vmatpush1.xpose.msra.mxu0 %v34
    %84 = vmatprep.subr.mxu0 0.0
    %85 = vmatpush1.xpose.msra.mxu0 %v35
    %86 = vmatprep.subr.mxu0 0.0
    %87 = vmatpush1.xpose.msra.mxu0 %v36
    %88 = vmatprep.subr.mxu0 0.0
    %89 = vmatpush1.xpose.msra.mxu0 %v37
    %90 = vmatprep.subr.mxu0 0.0
    %91 = vmatpush1.xpose.msra.mxu0 %v38
    %92 = vmatprep.subr.mxu0 0.0
    %93 = vmatpush1.xpose.msra.mxu0 %v39
    %94 = vmatprep.subr.mxu0 0.0
    %95 = vmatpush1.xpose.msra.mxu0 %v40
    %96 = vmatprep.subr.mxu0 0.0
    %97 = vmatpush1.xpose.msra.mxu0 %v41
    %98 = vmatprep.subr.mxu0 0.0
    %99 = vmatpush1.xpose.msra.mxu0 %v42
    %100 = vmatprep.subr.mxu0 0.0
    %101 = vmatpush1.xpose.msra.mxu0 %v43
    %102 = vmatprep.subr.mxu0 0.0
    %103 = vmatpush1.xpose.msra.mxu0 %v44
    %104 = vmatprep.subr.mxu0 0.0
    %105 = vmatpush1.xpose.msra.mxu0 %v45
    %106 = vmatprep.subr.mxu0 0.0
    %107 = vmatpush1.xpose.msra.mxu0 %v46
    %108 = vmatprep.subr.mxu0 0.0
    %109 = vmatpush1.xpose.msra.mxu0 %v47
    %110 = vmatprep.subr.mxu0 0.0
    %111 = vmatpush1.xpose.msra.mxu0 %v48
    %112 = vmatprep.subr.mxu0 0.0
    %113 = vmatpush1.xpose.msra.mxu0 %v49
    %114 = vmatprep.subr.mxu0 0.0
    %115 = vmatpush1.xpose.msra.mxu0 %v50
    %116 = vmatprep.subr.mxu0 0.0
    %117 = vmatpush1.xpose.msra.mxu0 %v51
    %118 = vmatprep.subr.mxu0 0.0
    %119 = vmatpush1.xpose.msra.mxu0 %v52
    %120 = vmatprep.subr.mxu0 0.0
    %121 = vmatpush1.xpose.msra.mxu0 %v53
    %122 = vmatprep.subr.mxu0 0.0
    %123 = vmatpush1.xpose.msra.mxu0 %v54
    %124 = vmatprep.subr.mxu0 0.0
    %125 = vmatpush1.xpose.msra.mxu0 %v55
    %126 = vmatprep.subr.mxu0 0.0
    %127 = vmatpush1.xpose.msra.mxu0 %v56
    %128 = vmatprep.subr.mxu0 0.0
    %129 = vmatpush1.xpose.msra.mxu0 %v57
    %130 = vmatprep.subr.mxu0 0.0
    %131 = vmatpush1.xpose.msra.mxu0 %v58
    %132 = vmatprep.subr.mxu0 0.0
    %133 = vmatpush1.xpose.msra.mxu0 %v59
    %134 = vmatprep.subr.mxu0 0.0
    %135 = vmatpush1.xpose.msra.mxu0 %v60
    %136 = vmatprep.subr.mxu0 0.0
    %137 = vmatpush1.xpose.msra.mxu0 %v61
    %138 = vmatprep.mubr.f32.mxu0 0.0
    %139 = vmatmul.mubr.f32.gmra.mrb[0].mxu0 %v29
    %v140 = vpop.f32.mrb[0].mxu0
    %v141 = vadd.f32 %v67, %v140
    %v142 = vpop.f32.mrb[0].mxu0
    %v143 = vadd.f32 %v71, %v142
    %144 = vdwg.mxu0
    %145 = vst [vmem:[#allocation5] sm:$0xff] %v141
    %146 = vst [vmem:[#allocation5 + $0x8] sm:$0xff] %v143
    // Predicated region
    $region18: #{skipgram_forward.1} parent=1 // pred_check
      _
    $region19: #{skipgram_forward.1} parent=1 // pred_check_branch
      %148 = sbr.rel (0) target = $region21
    $region20: #{skipgram_forward.1} parent=1 // pred_region
      %s150 = ssub.s32 256, 256
      %151 = vsyncadd [#allocation4], %s150
      %s153 = sshll.u32 [#allocation5], 4
      %s154 = int_to_ptr.vmem [resolvable:$true] %s153
      %156 = dma.vmem_to_hbm [thread:$0]  %s154, 256, %s3, [#allocation4]
    $region21: #{skipgram_forward.1} parent=1 // pred_fallthru
      _
    // Predicated region
    $region22: #{skipgram_forward.1} parent=1 // pred_check
      _
    $region23: #{skipgram_forward.1} parent=1 // pred_check_branch
      %158 = sbr.rel (0) target = $region25
    $region24: #{skipgram_forward.1} parent=1 // pred_region
      %159 = dma.done [#allocation4], 256
    $region25: #{skipgram_forward.1} parent=1 // pred_fallthru
      _
    %160 = vsyncpa [#allocation3], 1
    %161 = vsyncpa [#allocation4], 1

</llo_original>
